<compile_context>
chip_gen: v6e
topology: v6e:2x2x1
jax: 0.10.0
libtpu: 0.0.40
codegen_flags: <defaults>
</compile_context>

<pallas_src>
import functools

import jax
import jax.numpy as jnp
import numpy as np
from jax.experimental import pallas as pl
from jax.experimental.pallas import tpu as pltpu


def simple_cnn_kernel(x_ref, w1a_ref, w1b_ref, b1a_ref, b1b_ref,
                      w2a_ref, w2b_ref, b2a_ref, b2b_ref, wp_ref, bp_ref,
                      o_ref, *, mxu_dtype):
    """One batch chunk, fully fused.

    x_ref   : (chunk_n, C_in*L)       lane axis = (channel, position) features
    w1a/w1b : (C_in*L, (H0//2)*L)     banded conv1 weights, even / odd out chans
    w2a/w2b : ((H0//2)*L, (H1//2)*L)  banded conv2 weights, even / odd out chans
    b*      : (1, O*L)                per-output-channel bias tiled over L
    wp      : (num_classes, out_ch*L), bp: (num_classes, 1)
    o_ref   : (num_classes, chunk_n)  lane-dense transposed scores
    """
    def mm(a, b):
        return jnp.dot(a.astype(mxu_dtype), b.astype(mxu_dtype),
                       preferred_element_type=jnp.float32)

    x = x_ref[...]

    # conv1 (+bias, ReLU), even/odd output channels as two matmul halves;
    # channel-pair MaxPool1d == elementwise max of the two halves (one vmax).
    y1a = jnp.maximum(mm(x, w1a_ref[...]) + b1a_ref[...], 0.0)
    y1b = jnp.maximum(mm(x, w1b_ref[...]) + b1b_ref[...], 0.0)
    p1 = jnp.maximum(y1a, y1b)                                 # (chunk_n, H1*L)

    # conv2 (+bias, ReLU) + channel-pair maxpool, same scheme.
    y2a = jnp.maximum(mm(p1, w2a_ref[...]) + b2a_ref[...], 0.0)
    y2b = jnp.maximum(mm(p1, w2b_ref[...]) + b2b_ref[...], 0.0)
    p2 = jnp.maximum(y2a, y2b)                                 # (chunk_n, out_ch*L)

    # Linear: p2's lane order is exactly the channel-major flatten the
    # projection expects, so this is one direct MXU dot (no seg selector,
    # no lane-tiled weights).  Transposed so the store is lane-dense.
    scores_t = mm(wp_ref[...], p2.T) + bp_ref[...]             # (Q, chunk_n)
    o_ref[...] = scores_t.astype(o_ref.dtype)


def _band_expand(w, L):
    """Conv1d(k=3, padding=1) weight (O, C, 3) -> banded matmul operand
    (C*L, O*L) with  We[c*L+s, o*L+t] = w[o, c, s-t+1] if |s-t|<=1 else 0."""
    O, C, K = w.shape
    s = jnp.arange(L)[:, None]                     # input position
    t = jnp.arange(L)[None, :]                     # output position
    k = s - t + (K // 2)                           # tap index
    valid = (k >= 0) & (k < K)
    kc = jnp.clip(k, 0, K - 1)
    taps = w[:, :, kc]                             # (O, C, L, L)
    taps = jnp.where(valid[None, None, :, :], taps, 0.0)
    return jnp.transpose(taps, (1, 2, 0, 3)).reshape(C * L, O * L)


@functools.partial(jax.jit, static_argnames=("max_chunk", "mxu_bf16"))
def simple_cnn_forward(x, params, *, max_chunk=256, mxu_bf16=False):
    """x: (N, C_in, L); params are PyTorch-shaped arrays. Returns (N, num_classes).

    max_chunk: per-grid-step batch chunk (multiple of 128) for large N;
               small batches run as a single padded chunk (grid of 1).
    mxu_bf16 : cast matmul operands to bf16 (v6e/v7x MXU fast path);
               keep False for strict f32 comparison against the reference.
    """
    w1, b1, w2, b2, wp, bp = (params[k] for k in ("w1", "b1", "w2", "b2", "wp", "bp"))
    N, C_in, L = x.shape
    H0 = w1.shape[0]
    H1 = w2.shape[0]
    Q = wp.shape[0]
    out_ch = H1 // 2
    assert H0 % 2 == 0 and H1 % 2 == 0 and H0 // 2 == H1
    assert wp.shape[1] == out_ch * L

    # ---- chunking: whole padded batch in one step when it fits, otherwise
    # 128-multiple chunks so every block stays (8,128)-legal and the output
    # store is an unmasked lane-dense vst.  >=2 chunks -> v7x megacore split.
    if N <= max_chunk:
        n_chunks = 1
        chunk_n = max(8, -(-N // 8) * 8)
    else:
        assert max_chunk % 128 == 0
        chunk_n = max_chunk
        n_chunks = -(-N // chunk_n)
    N_pad = n_chunks * chunk_n

    F_in = C_in * L
    F_mid = H1 * L            # (H0 // 2) * L
    F_out = out_ch * L

    # ---- host-side weight plumbing (tiny, amortized; no chunk_n-scaled tensors)
    # banded conv weights, output channels split even/odd so the channel-pair
    # maxpool becomes a contiguous half-max of two matmul results.
    w1a = _band_expand(w1[0::2], L)                # (F_in, F_mid)
    w1b = _band_expand(w1[1::2], L)
    w2a = _band_expand(w2[0::2], L)                # (F_mid, F_out)
    w2b = _band_expand(w2[1::2], L)
    b1a = jnp.repeat(b1[0::2], L)[None, :]         # (1, F_mid)
    b1b = jnp.repeat(b1[1::2], L)[None, :]
    b2a = jnp.repeat(b2[0::2], L)[None, :]         # (1, F_out)
    b2b = jnp.repeat(b2[1::2], L)[None, :]
    bp2 = bp[:, None]                              # (Q, 1)

    # x.reshape(N, C*L) is already the kernel's lane order -> no transpose,
    # only zero-padding of the batch rows.
    # TODO(synk): have the producer emit x pre-padded to N_pad to drop this pad copy.
    x2 = jnp.pad(x.reshape(N, F_in), ((0, N_pad - N), (0, 0)))

    kernel = functools.partial(
        simple_cnn_kernel,
        mxu_dtype=jnp.bfloat16 if mxu_bf16 else jnp.float32)

    out = pl.pallas_call(
        kernel,
        out_shape=jax.ShapeDtypeStruct((Q, N_pad), jnp.float32),
        grid_spec=pltpu.PrefetchScalarGridSpec(
            num_scalar_prefetch=0,
            grid=(n_chunks,),
            in_specs=[
                pl.BlockSpec((chunk_n, F_in), lambda i: (i, 0)),   # x chunk
                pl.BlockSpec((F_in, F_mid), lambda i: (0, 0)),     # w1 even
                pl.BlockSpec((F_in, F_mid), lambda i: (0, 0)),     # w1 odd
                pl.BlockSpec((1, F_mid), lambda i: (0, 0)),        # b1 even
                pl.BlockSpec((1, F_mid), lambda i: (0, 0)),        # b1 odd
                pl.BlockSpec((F_mid, F_out), lambda i: (0, 0)),    # w2 even
                pl.BlockSpec((F_mid, F_out), lambda i: (0, 0)),    # w2 odd
                pl.BlockSpec((1, F_out), lambda i: (0, 0)),        # b2 even
                pl.BlockSpec((1, F_out), lambda i: (0, 0)),        # b2 odd
                pl.BlockSpec((Q, F_out), lambda i: (0, 0)),        # wp
                pl.BlockSpec((Q, 1), lambda i: (0, 0)),            # bp
            ],
            out_specs=pl.BlockSpec((Q, chunk_n), lambda i: (0, i)),
        ),
        compiler_params=pltpu.CompilerParams(
            dimension_semantics=("parallel",),
            vmem_limit_bytes=32 * 1024 * 1024),
    )(x2, w1a, w1b, b1a, b1b, w2a, w2b, b2a, b2b, wp, bp2)

    # (Q, N_pad) -> (N, Q); padded batch rows are dropped.
    return out[:, :N].T


def reference_forward(x, params):
    """Pure-JAX reference matching the PyTorch forward semantics."""
    w1, b1, w2, b2, wp, bp = (params[k] for k in ("w1", "b1", "w2", "b2", "wp", "bp"))

    def conv_relu(inp, w, b):
        N, _, L = inp.shape
        pad = jnp.pad(inp, ((0, 0), (0, 0), (1, 1)))
        y = (jnp.einsum("oc,ncl->nol", w[:, :, 0], pad[:, :, 0:L])
             + jnp.einsum("oc,ncl->nol", w[:, :, 1], pad[:, :, 1:L + 1])
             + jnp.einsum("oc,ncl->nol", w[:, :, 2], pad[:, :, 2:L + 2]))
        return jax.nn.relu(y + b[None, :, None])

    N, _, L = x.shape
    y1 = conv_relu(x, w1, b1)
    p1 = y1.reshape(N, y1.shape[1] // 2, 2, L).max(axis=2)   # MaxPool1d over channels
    y2 = conv_relu(p1, w2, b2)
    p2 = y2.reshape(N, y2.shape[1] // 2, 2, L).max(axis=2)
    flat = p2.reshape(N, -1)                                 # (N, T*D), channel-major
    return flat @ wp.T + bp[None, :]


if __name__ == "__main__":
    # Small shapes consistent with the module: input_size=4, hidden_size=(16, 8),
    # D (sequence length) = 16, num_classes=2, batch=2.
    N, C_in, L = 2, 4, 16
    H0, H1 = 16, 8          # hidden_size; requires H0 // 2 == H1 (as in the module)
    num_classes = 2
    out_ch = H1 // 2

    key = jax.random.PRNGKey(0)
    ks = jax.random.split(key, 7)
    params = dict(
        w1=0.1 * jax.random.normal(ks[0], (H0, C_in, 3), jnp.float32),
        b1=0.1 * jax.random.normal(ks[1], (H0,), jnp.float32),
        w2=0.1 * jax.random.normal(ks[2], (H1, H1, 3), jnp.float32),
        b2=0.1 * jax.random.normal(ks[3], (H1,), jnp.float32),
        wp=0.1 * jax.random.normal(ks[4], (num_classes, out_ch * L), jnp.float32),
        bp=0.1 * jax.random.normal(ks[5], (num_classes,), jnp.float32),
    )
    x = jax.random.normal(ks[6], (N, C_in, L), jnp.float32)

    scores = jax.block_until_ready(simple_cnn_forward(x, params))
    ref = reference_forward(x, params)
    # f32 MXU path: tolerance loose enough for matmul accumulation-order
    # differences, tight enough to catch any layout / semantics bug.
    np.testing.assert_allclose(np.asarray(scores), np.asarray(ref),
                               rtol=1e-3, atol=1e-3)
    print("KERNEL_OK")
</pallas_src>

<mosaic_0001>
module attributes {stable_mosaic.version = 11 : i64} {
  func.func @simple_cnn_kernel(%arg0: i32, %arg1: memref<8x64xf32, #tpu.memory_space<vmem>>, %arg2: memref<64x128xf32, #tpu.memory_space<vmem>>, %arg3: memref<64x128xf32, #tpu.memory_space<vmem>>, %arg4: memref<1x128xf32, #tpu.memory_space<vmem>>, %arg5: memref<1x128xf32, #tpu.memory_space<vmem>>, %arg6: memref<128x64xf32, #tpu.memory_space<vmem>>, %arg7: memref<128x64xf32, #tpu.memory_space<vmem>>, %arg8: memref<1x64xf32, #tpu.memory_space<vmem>>, %arg9: memref<1x64xf32, #tpu.memory_space<vmem>>, %arg10: memref<2x64xf32, #tpu.memory_space<vmem>>, %arg11: memref<2x1xf32, #tpu.memory_space<vmem>>, %arg12: memref<2x8xf32, #tpu.memory_space<vmem>>) attributes {dimension_semantics = [#tpu.dimension_semantics<parallel>], iteration_bounds = array<i64: 1>, scalar_prefetch = 0 : i64, scratch_operands = 0 : i64, tpu.core_type = #tpu.core_type<tc>, window_params = [{transform_indices = @transform_0, window_bounds = array<i64: 8, 64>}, {pipeline_mode = #tpu.pipeline_mode<synchronous>, transform_indices = @transform_1, window_bounds = array<i64: 64, 128>}, {pipeline_mode = #tpu.pipeline_mode<synchronous>, transform_indices = @transform_2, window_bounds = array<i64: 64, 128>}, {pipeline_mode = #tpu.pipeline_mode<synchronous>, transform_indices = @transform_3, window_bounds = array<i64: 1, 128>}, {pipeline_mode = #tpu.pipeline_mode<synchronous>, transform_indices = @transform_4, window_bounds = array<i64: 1, 128>}, {pipeline_mode = #tpu.pipeline_mode<synchronous>, transform_indices = @transform_5, window_bounds = array<i64: 128, 64>}, {pipeline_mode = #tpu.pipeline_mode<synchronous>, transform_indices = @transform_6, window_bounds = array<i64: 128, 64>}, {pipeline_mode = #tpu.pipeline_mode<synchronous>, transform_indices = @transform_7, window_bounds = array<i64: 1, 64>}, {pipeline_mode = #tpu.pipeline_mode<synchronous>, transform_indices = @transform_8, window_bounds = array<i64: 1, 64>}, {pipeline_mode = #tpu.pipeline_mode<synchronous>, transform_indices = @transform_9, window_bounds = array<i64: 2, 64>}, {pipeline_mode = #tpu.pipeline_mode<synchronous>, transform_indices = @transform_10, window_bounds = array<i64: 2, 1>}, {transform_indices = @transform_11, window_bounds = array<i64: 2, 8>}]} {
    %c0 = arith.constant 0 : index
    %c0_0 = arith.constant 0 : index
    %0 = vector.load %arg1[%c0, %c0_0] : memref<8x64xf32, #tpu.memory_space<vmem>>, vector<8x64xf32>
    %c0_1 = arith.constant 0 : index
    %c0_2 = arith.constant 0 : index
    %1 = vector.load %arg2[%c0_1, %c0_2] : memref<64x128xf32, #tpu.memory_space<vmem>>, vector<64x128xf32>
    %cst = arith.constant dense<0.000000e+00> : vector<8x128xf32>
    %2 = tpu.matmul %0, %1, %cst {dimension_numbers = #tpu.dot_dimension_numbers<[1], [0], [0], [1], [0, 0, 1, 1], [], []>} : vector<8x64xf32>, vector<64x128xf32>, vector<8x128xf32> -> vector<8x128xf32>
    %c0_3 = arith.constant 0 : index
    %c0_4 = arith.constant 0 : index
    %3 = vector.load %arg4[%c0_3, %c0_4] : memref<1x128xf32, #tpu.memory_space<vmem>>, vector<1x128xf32>
    %4 = vector.broadcast %3 : vector<1x128xf32> to vector<8x128xf32>
    %5 = arith.addf %2, %4 : vector<8x128xf32>
    %cst_5 = arith.constant 0.000000e+00 : f32
    %6 = vector.broadcast %cst_5 : f32 to vector<8x128xf32>
    %7 = arith.maximumf %5, %6 : vector<8x128xf32>
    %c0_6 = arith.constant 0 : index
    %c0_7 = arith.constant 0 : index
    %8 = vector.load %arg3[%c0_6, %c0_7] : memref<64x128xf32, #tpu.memory_space<vmem>>, vector<64x128xf32>
    %cst_8 = arith.constant dense<0.000000e+00> : vector<8x128xf32>
    %9 = tpu.matmul %0, %8, %cst_8 {dimension_numbers = #tpu.dot_dimension_numbers<[1], [0], [0], [1], [0, 0, 1, 1], [], []>} : vector<8x64xf32>, vector<64x128xf32>, vector<8x128xf32> -> vector<8x128xf32>
    %c0_9 = arith.constant 0 : index
    %c0_10 = arith.constant 0 : index
    %10 = vector.load %arg5[%c0_9, %c0_10] : memref<1x128xf32, #tpu.memory_space<vmem>>, vector<1x128xf32>
    %11 = vector.broadcast %10 : vector<1x128xf32> to vector<8x128xf32>
    %12 = arith.addf %9, %11 : vector<8x128xf32>
    %cst_11 = arith.constant 0.000000e+00 : f32
    %13 = vector.broadcast %cst_11 : f32 to vector<8x128xf32>
    %14 = arith.maximumf %12, %13 : vector<8x128xf32>
    %15 = arith.maximumf %7, %14 : vector<8x128xf32>
    %c0_12 = arith.constant 0 : index
    %c0_13 = arith.constant 0 : index
    %16 = vector.load %arg6[%c0_12, %c0_13] : memref<128x64xf32, #tpu.memory_space<vmem>>, vector<128x64xf32>
    %cst_14 = arith.constant dense<0.000000e+00> : vector<8x64xf32>
    %17 = tpu.matmul %15, %16, %cst_14 {dimension_numbers = #tpu.dot_dimension_numbers<[1], [0], [0], [1], [0, 0, 1, 1], [], []>} : vector<8x128xf32>, vector<128x64xf32>, vector<8x64xf32> -> vector<8x64xf32>
    %c0_15 = arith.constant 0 : index
    %c0_16 = arith.constant 0 : index
    %18 = vector.load %arg8[%c0_15, %c0_16] : memref<1x64xf32, #tpu.memory_space<vmem>>, vector<1x64xf32>
    %19 = vector.broadcast %18 : vector<1x64xf32> to vector<8x64xf32>
    %20 = arith.addf %17, %19 : vector<8x64xf32>
    %cst_17 = arith.constant 0.000000e+00 : f32
    %21 = vector.broadcast %cst_17 : f32 to vector<8x64xf32>
    %22 = arith.maximumf %20, %21 : vector<8x64xf32>
    %c0_18 = arith.constant 0 : index
    %c0_19 = arith.constant 0 : index
    %23 = vector.load %arg7[%c0_18, %c0_19] : memref<128x64xf32, #tpu.memory_space<vmem>>, vector<128x64xf32>
    %cst_20 = arith.constant dense<0.000000e+00> : vector<8x64xf32>
    %24 = tpu.matmul %15, %23, %cst_20 {dimension_numbers = #tpu.dot_dimension_numbers<[1], [0], [0], [1], [0, 0, 1, 1], [], []>} : vector<8x128xf32>, vector<128x64xf32>, vector<8x64xf32> -> vector<8x64xf32>
    %c0_21 = arith.constant 0 : index
    %c0_22 = arith.constant 0 : index
    %25 = vector.load %arg9[%c0_21, %c0_22] : memref<1x64xf32, #tpu.memory_space<vmem>>, vector<1x64xf32>
    %26 = vector.broadcast %25 : vector<1x64xf32> to vector<8x64xf32>
    %27 = arith.addf %24, %26 : vector<8x64xf32>
    %cst_23 = arith.constant 0.000000e+00 : f32
    %28 = vector.broadcast %cst_23 : f32 to vector<8x64xf32>
    %29 = arith.maximumf %27, %28 : vector<8x64xf32>
    %30 = arith.maximumf %22, %29 : vector<8x64xf32>
    %c0_24 = arith.constant 0 : index
    %c0_25 = arith.constant 0 : index
    %31 = vector.load %arg10[%c0_24, %c0_25] : memref<2x64xf32, #tpu.memory_space<vmem>>, vector<2x64xf32>
    %32 = tpu.transpose %30, [1, 0] : vector<8x64xf32> -> vector<64x8xf32>
    %cst_26 = arith.constant dense<0.000000e+00> : vector<2x8xf32>
    %33 = tpu.matmul %31, %32, %cst_26 {dimension_numbers = #tpu.dot_dimension_numbers<[1], [0], [0], [1], [0, 0, 1, 1], [], []>} : vector<2x64xf32>, vector<64x8xf32>, vector<2x8xf32> -> vector<2x8xf32>
    %c0_27 = arith.constant 0 : index
    %c0_28 = arith.constant 0 : index
    %34 = vector.load %arg11[%c0_27, %c0_28] : memref<2x1xf32, #tpu.memory_space<vmem>>, vector<2x1xf32>
    %35 = vector.broadcast %34 : vector<2x1xf32> to vector<2x8xf32>
    %36 = arith.addf %33, %35 : vector<2x8xf32>
    %c0_29 = arith.constant 0 : index
    %c0_30 = arith.constant 0 : index
    %37 = vector.load %arg12[%c0_29, %c0_30] : memref<2x8xf32, #tpu.memory_space<vmem>>, vector<2x8xf32>
    tpu.vector_store %arg12[%c0_29, %c0_30], %36 {strides = array<i32>} : memref<2x8xf32, #tpu.memory_space<vmem>>, vector<2x8xf32>,
    return
  }
  func.func @transform_0(%arg0: i32) -> (i32, i32) {
    %c0_i32 = arith.constant 0 : i32
    %c0_i32_0 = arith.constant 0 : i32
    return %arg0, %c0_i32 : i32, i32
  }
  func.func @transform_1(%arg0: i32) -> (i32, i32) {
    %c0_i32 = arith.constant 0 : i32
    %c0_i32_0 = arith.constant 0 : i32
    %c0_i32_1 = arith.constant 0 : i32
    return %c0_i32, %c0_i32_0 : i32, i32
  }
  func.func @transform_2(%arg0: i32) -> (i32, i32) {
    %c0_i32 = arith.constant 0 : i32
    %c0_i32_0 = arith.constant 0 : i32
    %c0_i32_1 = arith.constant 0 : i32
    return %c0_i32, %c0_i32_0 : i32, i32
  }
  func.func @transform_3(%arg0: i32) -> (i32, i32) {
    %c0_i32 = arith.constant 0 : i32
    %c0_i32_0 = arith.constant 0 : i32
    %c0_i32_1 = arith.constant 0 : i32
    return %c0_i32, %c0_i32_0 : i32, i32
  }
  func.func @transform_4(%arg0: i32) -> (i32, i32) {
    %c0_i32 = arith.constant 0 : i32
    %c0_i32_0 = arith.constant 0 : i32
    %c0_i32_1 = arith.constant 0 : i32
    return %c0_i32, %c0_i32_0 : i32, i32
  }
  func.func @transform_5(%arg0: i32) -> (i32, i32) {
    %c0_i32 = arith.constant 0 : i32
    %c0_i32_0 = arith.constant 0 : i32
    %c0_i32_1 = arith.constant 0 : i32
    return %c0_i32, %c0_i32_0 : i32, i32
  }
  func.func @transform_6(%arg0: i32) -> (i32, i32) {
    %c0_i32 = arith.constant 0 : i32
    %c0_i32_0 = arith.constant 0 : i32
    %c0_i32_1 = arith.constant 0 : i32
    return %c0_i32, %c0_i32_0 : i32, i32
  }
  func.func @transform_7(%arg0: i32) -> (i32, i32) {
    %c0_i32 = arith.constant 0 : i32
    %c0_i32_0 = arith.constant 0 : i32
    %c0_i32_1 = arith.constant 0 : i32
    return %c0_i32, %c0_i32_0 : i32, i32
  }
  func.func @transform_8(%arg0: i32) -> (i32, i32) {
    %c0_i32 = arith.constant 0 : i32
    %c0_i32_0 = arith.constant 0 : i32
    %c0_i32_1 = arith.constant 0 : i32
    return %c0_i32, %c0_i32_0 : i32, i32
  }
  func.func @transform_9(%arg0: i32) -> (i32, i32) {
    %c0_i32 = arith.constant 0 : i32
    %c0_i32_0 = arith.constant 0 : i32
    %c0_i32_1 = arith.constant 0 : i32
    return %c0_i32, %c0_i32_0 : i32, i32
  }
  func.func @transform_10(%arg0: i32) -> (i32, i32) {
    %c0_i32 = arith.constant 0 : i32
    %c0_i32_0 = arith.constant 0 : i32
    %c0_i32_1 = arith.constant 0 : i32
    return %c0_i32, %c0_i32_0 : i32, i32
  }
  func.func @transform_11(%arg0: i32) -> (i32, i32) {
    %c0_i32 = arith.constant 0 : i32
    %c0_i32_0 = arith.constant 0 : i32
    return %c0_i32, %arg0 : i32, i32
  }
}

</mosaic_0001>

<llo_original>
// kernel: simple_cnn_forward.1
$region0: #{simple_cnn_forward.1}
  #allocation0 [shape = 'u32[]', space=smem, size = 0x4, offset = 0x4, fixed_abs, tag = 'smem constant byte address 0x4 - core index']
  #allocation1 [shape = 'u32[144,128]{1,0:T(1,128)}', space=vmem, size = 0x12000, scoped, tag = 'internal scratch']
  %s0 = inlined_call_operand.vmem [shape: f32[8,64], index: 0, kind: input, shape index: {}]
  %s1 = inlined_call_operand.vmem [shape: f32[64,128], index: 1, kind: input, shape index: {}]
  %s2 = inlined_call_operand.vmem [shape: f32[64,128], index: 2, kind: input, shape index: {}]
  %s3 = inlined_call_operand.vmem [shape: f32[1,128], index: 3, kind: input, shape index: {}]
  %s4 = inlined_call_operand.vmem [shape: f32[1,128], index: 4, kind: input, shape index: {}]
  %s5 = inlined_call_operand.vmem [shape: f32[128,64], index: 5, kind: input, shape index: {}]
  %s6 = inlined_call_operand.vmem [shape: f32[128,64], index: 6, kind: input, shape index: {}]
  %s7 = inlined_call_operand.vmem [shape: f32[1,64], index: 7, kind: input, shape index: {}]
  %s8 = inlined_call_operand.vmem [shape: f32[1,64], index: 8, kind: input, shape index: {}]
  %s9 = inlined_call_operand.vmem [shape: f32[2,64], index: 9, kind: input, shape index: {}]
  %s10 = inlined_call_operand.vmem [shape: f32[2,1], index: 10, kind: input, shape index: {}]
  %s11 = inlined_call_operand.vmem [shape: f32[2,8], index: 11, kind: output, shape index: {}]
  %s12 = sld [smem:[#allocation0]]
  $region54: #{simple_cnn_forward.1} parent=0
    _
  %s14 = ssub.s32 1, %s12
  %s15 = scalar_select 0, %s14, %s12
  // Predicated region
  $region2: #{simple_cnn_forward.1} parent=0 // pred_check
    _
  $region3: #{simple_cnn_forward.1} parent=0 // pred_check_branch
    %17 = sbr.rel (0) target = $region5
  $region4: #{simple_cnn_forward.1} parent=0 // pred_region
    _
  $region5: #{simple_cnn_forward.1} parent=0 // pred_fallthru
    _
  // Predicated region
  $region6: #{simple_cnn_forward.1} parent=0 // pred_check
    _
  $region7: #{simple_cnn_forward.1} parent=0 // pred_check_branch
    %19 = sbr.rel (0) target = $region9
  $region8: #{simple_cnn_forward.1} parent=0 // pred_region
    _
  $region9: #{simple_cnn_forward.1} parent=0 // pred_fallthru
    _
  // Predicated region
  $region10: #{simple_cnn_forward.1} parent=0 // pred_check
    _
  $region11: #{simple_cnn_forward.1} parent=0 // pred_check_branch
    %21 = sbr.rel (0) target = $region13
  $region12: #{simple_cnn_forward.1} parent=0 // pred_region
    _
  $region13: #{simple_cnn_forward.1} parent=0 // pred_fallthru
    _
  // Predicated region
  $region14: #{simple_cnn_forward.1} parent=0 // pred_check
    _
  $region15: #{simple_cnn_forward.1} parent=0 // pred_check_branch
    %23 = sbr.rel (0) target = $region17
  $region16: #{simple_cnn_forward.1} parent=0 // pred_region
    _
  $region17: #{simple_cnn_forward.1} parent=0 // pred_fallthru
    _
  // Predicated region
  $region18: #{simple_cnn_forward.1} parent=0 // pred_check
    _
  $region19: #{simple_cnn_forward.1} parent=0 // pred_check_branch
    %25 = sbr.rel (0) target = $region21
  $region20: #{simple_cnn_forward.1} parent=0 // pred_region
    _
  $region21: #{simple_cnn_forward.1} parent=0 // pred_fallthru
    _
  // Predicated region
  $region22: #{simple_cnn_forward.1} parent=0 // pred_check
    _
  $region23: #{simple_cnn_forward.1} parent=0 // pred_check_branch
    %27 = sbr.rel (0) target = $region25
  $region24: #{simple_cnn_forward.1} parent=0 // pred_region
    _
  $region25: #{simple_cnn_forward.1} parent=0 // pred_fallthru
    _
  // Predicated region
  $region26: #{simple_cnn_forward.1} parent=0 // pred_check
    _
  $region27: #{simple_cnn_forward.1} parent=0 // pred_check_branch
    %29 = sbr.rel (0) target = $region29
  $region28: #{simple_cnn_forward.1} parent=0 // pred_region
    _
  $region29: #{simple_cnn_forward.1} parent=0 // pred_fallthru
    _
  // Predicated region
  $region30: #{simple_cnn_forward.1} parent=0 // pred_check
    _
  $region31: #{simple_cnn_forward.1} parent=0 // pred_check_branch
    %31 = sbr.rel (0) target = $region33
  $region32: #{simple_cnn_forward.1} parent=0 // pred_region
    _
  $region33: #{simple_cnn_forward.1} parent=0 // pred_fallthru
    _
  // Predicated region
  $region34: #{simple_cnn_forward.1} parent=0 // pred_check
    _
  $region35: #{simple_cnn_forward.1} parent=0 // pred_check_branch
    %33 = sbr.rel (0) target = $region37
  $region36: #{simple_cnn_forward.1} parent=0 // pred_region
    _
  $region37: #{simple_cnn_forward.1} parent=0 // pred_fallthru
    _
  // Predicated region
  $region38: #{simple_cnn_forward.1} parent=0 // pred_check
    _
  $region39: #{simple_cnn_forward.1} parent=0 // pred_check_branch
    %35 = sbr.rel (0) target = $region41
  $region40: #{simple_cnn_forward.1} parent=0 // pred_region
    _
  $region41: #{simple_cnn_forward.1} parent=0 // pred_fallthru
    _
  // Predicated region
  $region42: #{simple_cnn_forward.1} parent=0 // pred_check
    _
  $region43: #{simple_cnn_forward.1} parent=0 // pred_check_branch
    %37 = sbr.rel (0) target = $region45
  $region44: #{simple_cnn_forward.1} parent=0 // pred_region
    _
  $region45: #{simple_cnn_forward.1} parent=0 // pred_fallthru
    _
  %v38 = vld [vmem:[%s0] sm:$0xff]
  %v39 = vld [vmem:[%s1] sm:$0xff]
  %v40 = vld [vmem:[%s1 + $0x8] sm:$0xff]
  %v41 = vld [vmem:[%s1 + $0x10] sm:$0xff]
  %v42 = vld [vmem:[%s1 + $0x18] sm:$0xff]
  %v43 = vld [vmem:[%s1 + $0x20] sm:$0xff]
  %v44 = vld [vmem:[%s1 + $0x28] sm:$0xff]
  %v45 = vld [vmem:[%s1 + $0x30] sm:$0xff]
  %v46 = vld [vmem:[%s1 + $0x38] sm:$0xff]
  %v47 = vld [vmem:[%s3] sm:$0x1]
  %v49 = vlaneseq
  %v50 = vshrl.u32 %v49, 7
  %v51 = vsub.s32 0, %v50
  %v52 = vrot.slane %v47, %v51
  %vm54 = vcmask 523264
  %v56 = vsel %vm54, %v38, 0
  %58 = vmatprep.subr.mxu0 0.0
  %59 = vmatpush1.msra.mxu0 0.0
  %60 = vmatprep.subr.mxu0 0.0
  %61 = vmatpush1.msra.mxu0 0.0
  %62 = vmatprep.subr.mxu0 0.0
  %63 = vmatpush1.msra.mxu0 0.0
  %64 = vmatprep.subr.mxu0 0.0
  %65 = vmatpush1.msra.mxu0 0.0
  %66 = vmatprep.subr.mxu0 0.0
  %67 = vmatpush1.msra.mxu0 0.0
  %68 = vmatprep.subr.mxu0 0.0
  %69 = vmatpush1.msra.mxu0 0.0
  %70 = vmatprep.subr.mxu0 0.0
  %71 = vmatpush1.msra.mxu0 0.0
  %72 = vmatprep.subr.mxu0 0.0
  %73 = vmatpush1.msra.mxu0 0.0
  %74 = vmatprep.subr.mxu0 0.0
  %75 = vmatpush1.msra.mxu0 %v46
  %76 = vmatprep.subr.mxu0 0.0
  %77 = vmatpush1.msra.mxu0 %v45
  %78 = vmatprep.subr.mxu0 0.0
  %79 = vmatpush1.msra.mxu0 %v44
  %80 = vmatprep.subr.mxu0 0.0
  %81 = vmatpush1.msra.mxu0 %v43
  %82 = vmatprep.subr.mxu0 0.0
  %83 = vmatpush1.msra.mxu0 %v42
  %84 = vmatprep.subr.mxu0 0.0
  %85 = vmatpush1.msra.mxu0 %v41
  %86 = vmatprep.subr.mxu0 0.0
  %87 = vmatpush1.msra.mxu0 %v40
  %88 = vmatprep.subr.mxu0 0.0
  %89 = vmatpush1.msra.mxu0 %v39
  %90 = vmatprep.subr.mxu0 0.0
  %91 = vmatpush2.msra.mxu0 0.0
  %92 = vmatprep.subr.mxu0 0.0
  %93 = vmatpush2.msra.mxu0 0.0
  %94 = vmatprep.subr.mxu0 0.0
  %95 = vmatpush2.msra.mxu0 0.0
  %96 = vmatprep.subr.mxu0 0.0
  %97 = vmatpush2.msra.mxu0 0.0
  %98 = vmatprep.subr.mxu0 0.0
  %99 = vmatpush2.msra.mxu0 0.0
  %100 = vmatprep.subr.mxu0 0.0
  %101 = vmatpush2.msra.mxu0 0.0
  %102 = vmatprep.subr.mxu0 0.0
  %103 = vmatpush2.msra.mxu0 0.0
  %104 = vmatprep.subr.mxu0 0.0
  %105 = vmatpush2.msra.mxu0 0.0
  %106 = vmatprep.subr.mxu0 0.0
  %107 = vmatpush2.msra.mxu0 0.0
  %108 = vmatprep.subr.mxu0 0.0
  %109 = vmatpush2.msra.mxu0 0.0
  %110 = vmatprep.subr.mxu0 0.0
  %111 = vmatpush2.msra.mxu0 0.0
  %112 = vmatprep.subr.mxu0 0.0
  %113 = vmatpush2.msra.mxu0 0.0
  %114 = vmatprep.subr.mxu0 0.0
  %115 = vmatpush2.msra.mxu0 0.0
  %116 = vmatprep.subr.mxu0 0.0
  %117 = vmatpush2.msra.mxu0 0.0
  %118 = vmatprep.subr.mxu0 0.0
  %119 = vmatpush2.msra.mxu0 0.0
  %120 = vmatprep.subr.mxu0 0.0
  %121 = vmatpush2.msra.mxu0 0.0
  %122 = vmatprep.mubr.f32.mxu0 0.0
  %123 = vmatmul.mubr.f32.gmra.mxu0 %v56
  %v124 = vpop.f32.mrf.mxu0
  %v125 = vadd.f32 %v52, %v124
  %v126 = vpop.f32.mrf.mxu0
  %127 = vdwg.mxu0
  %v128 = vmax.f32 %v125, 0.0
  %v129 = vld [vmem:[%s2] sm:$0xff]
  %v130 = vld [vmem:[%s2 + $0x8] sm:$0xff]
  %v131 = vld [vmem:[%s2 + $0x10] sm:$0xff]
  %v132 = vld [vmem:[%s2 + $0x18] sm:$0xff]
  %v133 = vld [vmem:[%s2 + $0x20] sm:$0xff]
  %v134 = vld [vmem:[%s2 + $0x28] sm:$0xff]
  %v135 = vld [vmem:[%s2 + $0x30] sm:$0xff]
  %v136 = vld [vmem:[%s2 + $0x38] sm:$0xff]
  %v137 = vld [vmem:[%s4] sm:$0x1]
  %v139 = vlaneseq
  %v140 = vshrl.u32 %v139, 7
  %v141 = vsub.s32 0, %v140
  %v142 = vrot.slane %v137, %v141
  %144 = vmatprep.subr.mxu0 0.0
  %145 = vmatpush1.msra.mxu0 0.0
  %146 = vmatprep.subr.mxu0 0.0
  %147 = vmatpush1.msra.mxu0 0.0
  %148 = vmatprep.subr.mxu0 0.0
  %149 = vmatpush1.msra.mxu0 0.0
  %150 = vmatprep.subr.mxu0 0.0
  %151 = vmatpush1.msra.mxu0 0.0
  %152 = vmatprep.subr.mxu0 0.0
  %153 = vmatpush1.msra.mxu0 0.0
  %154 = vmatprep.subr.mxu0 0.0
  %155 = vmatpush1.msra.mxu0 0.0
  %156 = vmatprep.subr.mxu0 0.0
  %157 = vmatpush1.msra.mxu0 0.0
  %158 = vmatprep.subr.mxu0 0.0
  %159 = vmatpush1.msra.mxu0 0.0
  %160 = vmatprep.subr.mxu0 0.0
  %161 = vmatpush1.msra.mxu0 %v136
  %162 = vmatprep.subr.mxu0 0.0
  %163 = vmatpush1.msra.mxu0 %v135
  %164 = vmatprep.subr.mxu0 0.0
  %165 = vmatpush1.msra.mxu0 %v134
  %166 = vmatprep.subr.mxu0 0.0
  %167 = vmatpush1.msra.mxu0 %v133
  %168 = vmatprep.subr.mxu0 0.0
  %169 = vmatpush1.msra.mxu0 %v132
  %170 = vmatprep.subr.mxu0 0.0
  %171 = vmatpush1.msra.mxu0 %v131
  %172 = vmatprep.subr.mxu0 0.0
  %173 = vmatpush1.msra.mxu0 %v130
  %174 = vmatprep.subr.mxu0 0.0
  %175 = vmatpush1.msra.mxu0 %v129
  %176 = vmatprep.subr.mxu0 0.0
  %177 = vmatpush2.msra.mxu0 0.0
  %178 = vmatprep.subr.mxu0 0.0
  %179 = vmatpush2.msra.mxu0 0.0
  %180 = vmatprep.subr.mxu0 0.0
  %181 = vmatpush2.msra.mxu0 0.0
  %182 = vmatprep.subr.mxu0 0.0
  %183 = vmatpush2.msra.mxu0 0.0
  %184 = vmatprep.subr.mxu0 0.0
  %185 = vmatpush2.msra.mxu0 0.0
  %186 = vmatprep.subr.mxu0 0.0
  %187 = vmatpush2.msra.mxu0 0.0
  %188 = vmatprep.subr.mxu0 0.0
  %189 = vmatpush2.msra.mxu0 0.0
  %190 = vmatprep.subr.mxu0 0.0
  %191 = vmatpush2.msra.mxu0 0.0
  %192 = vmatprep.subr.mxu0 0.0
  %193 = vmatpush2.msra.mxu0 0.0
  %194 = vmatprep.subr.mxu0 0.0
  %195 = vmatpush2.msra.mxu0 0.0
  %196 = vmatprep.subr.mxu0 0.0
  %197 = vmatpush2.msra.mxu0 0.0
  %198 = vmatprep.subr.mxu0 0.0
  %199 = vmatpush2.msra.mxu0 0.0
  %200 = vmatprep.subr.mxu0 0.0
  %201 = vmatpush2.msra.mxu0 0.0
  %202 = vmatprep.subr.mxu0 0.0
  %203 = vmatpush2.msra.mxu0 0.0
  %204 = vmatprep.subr.mxu0 0.0
  %205 = vmatpush2.msra.mxu0 0.0
  %206 = vmatprep.subr.mxu0 0.0
  %207 = vmatpush2.msra.mxu0 0.0
  %208 = vmatprep.mubr.f32.mxu0 0.0
  %209 = vmatmul.mubr.f32.gmra.mxu0 %v56
  %v210 = vpop.f32.mrf.mxu0
  %v211 = vadd.f32 %v142, %v210
  %v212 = vpop.f32.mrf.mxu0
  %213 = vdwg.mxu0
  %v214 = vmax.f32 %v211, 0.0
  %v215 = vmax.f32 %v128, %v214
  %v216 = vld [vmem:[%s5] sm:$0xff]
  %v217 = vld [vmem:[%s5 + $0x8] sm:$0xff]
  %v218 = vld [vmem:[%s5 + $0x10] sm:$0xff]
  %v219 = vld [vmem:[%s5 + $0x18] sm:$0xff]
  %v220 = vld [vmem:[%s5 + $0x20] sm:$0xff]
  %v221 = vld [vmem:[%s5 + $0x28] sm:$0xff]
  %v222 = vld [vmem:[%s5 + $0x30] sm:$0xff]
  %v223 = vld [vmem:[%s5 + $0x38] sm:$0xff]
  %v224 = vld [vmem:[%s5 + $0x40] sm:$0xff]
  %v225 = vld [vmem:[%s5 + $0x48] sm:$0xff]
  %v226 = vld [vmem:[%s5 + $0x50] sm:$0xff]
  %v227 = vld [vmem:[%s5 + $0x58] sm:$0xff]
  %v228 = vld [vmem:[%s5 + $0x60] sm:$0xff]
  %v229 = vld [vmem:[%s5 + $0x68] sm:$0xff]
  %v230 = vld [vmem:[%s5 + $0x70] sm:$0xff]
  %v231 = vld [vmem:[%s5 + $0x78] sm:$0xff]
  %v232 = vld [vmem:[%s7] sm:$0x1]
  %v234 = vlaneseq
  %v235 = vshrl.u32 %v234, 7
  %v236 = vsub.s32 0, %v235
  %v237 = vrot.slane %v232, %v236
  %239 = vmatprep.subr.mxu0 0.0
  %240 = vmatpush1.msra.mxu0 %v231
  %241 = vmatprep.subr.mxu0 0.0
  %242 = vmatpush1.msra.mxu0 %v230
  %243 = vmatprep.subr.mxu0 0.0
  %244 = vmatpush1.msra.mxu0 %v229
  %245 = vmatprep.subr.mxu0 0.0
  %246 = vmatpush1.msra.mxu0 %v228
  %247 = vmatprep.subr.mxu0 0.0
  %248 = vmatpush1.msra.mxu0 %v227
  %249 = vmatprep.subr.mxu0 0.0
  %250 = vmatpush1.msra.mxu0 %v226
  %251 = vmatprep.subr.mxu0 0.0
  %252 = vmatpush1.msra.mxu0 %v225
  %253 = vmatprep.subr.mxu0 0.0
  %254 = vmatpush1.msra.mxu0 %v224
  %255 = vmatprep.subr.mxu0 0.0
  %256 = vmatpush1.msra.mxu0 %v223
  %257 = vmatprep.subr.mxu0 0.0
  %258 = vmatpush1.msra.mxu0 %v222
  %259 = vmatprep.subr.mxu0 0.0
  %260 = vmatpush1.msra.mxu0 %v221
  %261 = vmatprep.subr.mxu0 0.0
  %262 = vmatpush1.msra.mxu0 %v220
  %263 = vmatprep.subr.mxu0 0.0
  %264 = vmatpush1.msra.mxu0 %v219
  %265 = vmatprep.subr.mxu0 0.0
  %266 = vmatpush1.msra.mxu0 %v218
  %267 = vmatprep.subr.mxu0 0.0
  %268 = vmatpush1.msra.mxu0 %v217
  %269 = vmatprep.subr.mxu0 0.0
  %270 = vmatpush1.msra.mxu0 %v216
  %271 = vmatprep.subr.mxu0 0.0
  %272 = vmatpush2.msra.mxu0 0.0
  %273 = vmatprep.subr.mxu0 0.0
  %274 = vmatpush2.msra.mxu0 0.0
  %275 = vmatprep.subr.mxu0 0.0
  %276 = vmatpush2.msra.mxu0 0.0
  %277 = vmatprep.subr.mxu0 0.0
  %278 = vmatpush2.msra.mxu0 0.0
  %279 = vmatprep.subr.mxu0 0.0
  %280 = vmatpush2.msra.mxu0 0.0
  %281 = vmatprep.subr.mxu0 0.0
  %282 = vmatpush2.msra.mxu0 0.0
  %283 = vmatprep.subr.mxu0 0.0
  %284 = vmatpush2.msra.mxu0 0.0
  %285 = vmatprep.subr.mxu0 0.0
  %286 = vmatpush2.msra.mxu0 0.0
  %287 = vmatprep.subr.mxu0 0.0
  %288 = vmatpush2.msra.mxu0 0.0
  %289 = vmatprep.subr.mxu0 0.0
  %290 = vmatpush2.msra.mxu0 0.0
  %291 = vmatprep.subr.mxu0 0.0
  %292 = vmatpush2.msra.mxu0 0.0
  %293 = vmatprep.subr.mxu0 0.0
  %294 = vmatpush2.msra.mxu0 0.0
  %295 = vmatprep.subr.mxu0 0.0
  %296 = vmatpush2.msra.mxu0 0.0
  %297 = vmatprep.subr.mxu0 0.0
  %298 = vmatpush2.msra.mxu0 0.0
  %299 = vmatprep.subr.mxu0 0.0
  %300 = vmatpush2.msra.mxu0 0.0
  %301 = vmatprep.subr.mxu0 0.0
  %302 = vmatpush2.msra.mxu0 0.0
  %303 = vmatprep.mubr.f32.mxu0 0.0
  %304 = vmatmul.mubr.f32.gmra.mxu0 %v215
  %v305 = vpop.f32.mrf.mxu0
  %v306 = vadd.f32 %v237, %v305
  %v307 = vpop.f32.mrf.mxu0
  %308 = vdwg.mxu0
  %v309 = vmax.f32 %v306, 0.0
  %v310 = vld [vmem:[%s6] sm:$0xff]
  %v311 = vld [vmem:[%s6 + $0x8] sm:$0xff]
  %v312 = vld [vmem:[%s6 + $0x10] sm:$0xff]
  %v313 = vld [vmem:[%s6 + $0x18] sm:$0xff]
  %v314 = vld [vmem:[%s6 + $0x20] sm:$0xff]
  %v315 = vld [vmem:[%s6 + $0x28] sm:$0xff]
  %v316 = vld [vmem:[%s6 + $0x30] sm:$0xff]
  %v317 = vld [vmem:[%s6 + $0x38] sm:$0xff]
  %v318 = vld [vmem:[%s6 + $0x40] sm:$0xff]
  %v319 = vld [vmem:[%s6 + $0x48] sm:$0xff]
  %v320 = vld [vmem:[%s6 + $0x50] sm:$0xff]
  %v321 = vld [vmem:[%s6 + $0x58] sm:$0xff]
  %v322 = vld [vmem:[%s6 + $0x60] sm:$0xff]
  %v323 = vld [vmem:[%s6 + $0x68] sm:$0xff]
  %v324 = vld [vmem:[%s6 + $0x70] sm:$0xff]
  %v325 = vld [vmem:[%s6 + $0x78] sm:$0xff]
  %v326 = vld [vmem:[%s8] sm:$0x1]
  %v328 = vlaneseq
  %v329 = vshrl.u32 %v328, 7
  %v330 = vsub.s32 0, %v329
  %v331 = vrot.slane %v326, %v330
  %333 = vmatprep.subr.mxu0 0.0
  %334 = vmatpush1.msra.mxu0 %v325
  %335 = vmatprep.subr.mxu0 0.0
  %336 = vmatpush1.msra.mxu0 %v324
  %337 = vmatprep.subr.mxu0 0.0
  %338 = vmatpush1.msra.mxu0 %v323
  %339 = vmatprep.subr.mxu0 0.0
  %340 = vmatpush1.msra.mxu0 %v322
  %341 = vmatprep.subr.mxu0 0.0
  %342 = vmatpush1.msra.mxu0 %v321
  %343 = vmatprep.subr.mxu0 0.0
  %344 = vmatpush1.msra.mxu0 %v320
  %345 = vmatprep.subr.mxu0 0.0
  %346 = vmatpush1.msra.mxu0 %v319
  %347 = vmatprep.subr.mxu0 0.0
  %348 = vmatpush1.msra.mxu0 %v318
  %349 = vmatprep.subr.mxu0 0.0
  %350 = vmatpush1.msra.mxu0 %v317
  %351 = vmatprep.subr.mxu0 0.0
  %352 = vmatpush1.msra.mxu0 %v316
  %353 = vmatprep.subr.mxu0 0.0
  %354 = vmatpush1.msra.mxu0 %v315
  %355 = vmatprep.subr.mxu0 0.0
  %356 = vmatpush1.msra.mxu0 %v314
  %357 = vmatprep.subr.mxu0 0.0
  %358 = vmatpush1.msra.mxu0 %v313
  %359 = vmatprep.subr.mxu0 0.0
  %360 = vmatpush1.msra.mxu0 %v312
  %361 = vmatprep.subr.mxu0 0.0
  %362 = vmatpush1.msra.mxu0 %v311
  %363 = vmatprep.subr.mxu0 0.0
  %364 = vmatpush1.msra.mxu0 %v310
  %365 = vmatprep.subr.mxu0 0.0
  %366 = vmatpush2.msra.mxu0 0.0
  %367 = vmatprep.subr.mxu0 0.0
  %368 = vmatpush2.msra.mxu0 0.0
  %369 = vmatprep.subr.mxu0 0.0
  %370 = vmatpush2.msra.mxu0 0.0
  %371 = vmatprep.subr.mxu0 0.0
  %372 = vmatpush2.msra.mxu0 0.0
  %373 = vmatprep.subr.mxu0 0.0
  %374 = vmatpush2.msra.mxu0 0.0
  %375 = vmatprep.subr.mxu0 0.0
  %376 = vmatpush2.msra.mxu0 0.0
  %377 = vmatprep.subr.mxu0 0.0
  %378 = vmatpush2.msra.mxu0 0.0
  %379 = vmatprep.subr.mxu0 0.0
  %380 = vmatpush2.msra.mxu0 0.0
  %381 = vmatprep.subr.mxu0 0.0
  %382 = vmatpush2.msra.mxu0 0.0
  %383 = vmatprep.subr.mxu0 0.0
  %384 = vmatpush2.msra.mxu0 0.0
  %385 = vmatprep.subr.mxu0 0.0
  %386 = vmatpush2.msra.mxu0 0.0
  %387 = vmatprep.subr.mxu0 0.0
  %388 = vmatpush2.msra.mxu0 0.0
  %389 = vmatprep.subr.mxu0 0.0
  %390 = vmatpush2.msra.mxu0 0.0
  %391 = vmatprep.subr.mxu0 0.0
  %392 = vmatpush2.msra.mxu0 0.0
  %393 = vmatprep.subr.mxu0 0.0
  %394 = vmatpush2.msra.mxu0 0.0
  %395 = vmatprep.subr.mxu0 0.0
  %396 = vmatpush2.msra.mxu0 0.0
  %397 = vmatprep.mubr.f32.mxu0 0.0
  %398 = vmatmul.mubr.f32.gmra.mxu0 %v215
  %v399 = vpop.f32.mrf.mxu0
  %v400 = vadd.f32 %v331, %v399
  %v401 = vpop.f32.mrf.mxu0
  %402 = vdwg.mxu0
  %v403 = vmax.f32 %v400, 0.0
  %v404 = vmax.f32 %v309, %v403
  %v405 = vld [vmem:[%s9] sm:$0x3]
  %v406 = vld [vmem:[%s10] sm:$0x3]
  %408 = vset.pattern.permute.xlu0 0
  %409 = vperm.xlu0 %408, %v406
  %v410 = vpop.permute.xlu0 %409
  %v413 = vsel %vm54, %v405, 0
  %v416 = vsel %vm54, %v404, 0
  %418 = vmatprep.subr.mxu0 0.0
  %419 = vmatpush1.xpose.msra.mxu0 0.0
  %420 = vmatprep.subr.mxu0 0.0
  %421 = vmatpush1.xpose.msra.mxu0 0.0
  %422 = vmatprep.subr.mxu0 0.0
  %423 = vmatpush1.xpose.msra.mxu0 0.0
  %424 = vmatprep.subr.mxu0 0.0
  %425 = vmatpush1.xpose.msra.mxu0 0.0
  %426 = vmatprep.subr.mxu0 0.0
  %427 = vmatpush1.xpose.msra.mxu0 0.0
  %428 = vmatprep.subr.mxu0 0.0
  %429 = vmatpush1.xpose.msra.mxu0 0.0
  %430 = vmatprep.subr.mxu0 0.0
  %431 = vmatpush1.xpose.msra.mxu0 0.0
  %432 = vmatprep.subr.mxu0 0.0
  %433 = vmatpush1.xpose.msra.mxu0 0.0
  %434 = vmatprep.subr.mxu0 0.0
  %435 = vmatpush1.xpose.msra.mxu0 0.0
  %436 = vmatprep.subr.mxu0 0.0
  %437 = vmatpush1.xpose.msra.mxu0 0.0
  %438 = vmatprep.subr.mxu0 0.0
  %439 = vmatpush1.xpose.msra.mxu0 0.0
  %440 = vmatprep.subr.mxu0 0.0
  %441 = vmatpush1.xpose.msra.mxu0 0.0
  %442 = vmatprep.subr.mxu0 0.0
  %443 = vmatpush1.xpose.msra.mxu0 0.0
  %444 = vmatprep.subr.mxu0 0.0
  %445 = vmatpush1.xpose.msra.mxu0 0.0
  %446 = vmatprep.subr.mxu0 0.0
  %447 = vmatpush1.xpose.msra.mxu0 0.0
  %448 = vmatprep.subr.mxu0 0.0
  %449 = vmatpush1.xpose.msra.mxu0 %v416
  %450 = vmatprep.subr.mxu0 0.0
  %451 = vmatpush2.xpose.msra.mxu0 0.0
  %452 = vmatprep.subr.mxu0 0.0
  %453 = vmatpush2.xpose.msra.mxu0 0.0
  %454 = vmatprep.subr.mxu0 0.0
  %455 = vmatpush2.xpose.msra.mxu0 0.0
  %456 = vmatprep.subr.mxu0 0.0
  %457 = vmatpush2.xpose.msra.mxu0 0.0
  %458 = vmatprep.subr.mxu0 0.0
  %459 = vmatpush2.xpose.msra.mxu0 0.0
  %460 = vmatprep.subr.mxu0 0.0
  %461 = vmatpush2.xpose.msra.mxu0 0.0
  %462 = vmatprep.subr.mxu0 0.0
  %463 = vmatpush2.xpose.msra.mxu0 0.0
  %464 = vmatprep.subr.mxu0 0.0
  %465 = vmatpush2.xpose.msra.mxu0 0.0
  %466 = vmatprep.subr.mxu0 0.0
  %467 = vmatpush2.xpose.msra.mxu0 0.0
  %468 = vmatprep.subr.mxu0 0.0
  %469 = vmatpush2.xpose.msra.mxu0 0.0
  %470 = vmatprep.subr.mxu0 0.0
  %471 = vmatpush2.xpose.msra.mxu0 0.0
  %472 = vmatprep.subr.mxu0 0.0
  %473 = vmatpush2.xpose.msra.mxu0 0.0
  %474 = vmatprep.subr.mxu0 0.0
  %475 = vmatpush2.xpose.msra.mxu0 0.0
  %476 = vmatprep.subr.mxu0 0.0
  %477 = vmatpush2.xpose.msra.mxu0 0.0
  %478 = vmatprep.subr.mxu0 0.0
  %479 = vmatpush2.xpose.msra.mxu0 0.0
  %480 = vmatprep.subr.mxu0 0.0
  %481 = vmatpush2.xpose.msra.mxu0 0.0
  %482 = vmatprep.mubr.f32.mxu0 0.0
  %483 = vmatmul.mubr.f32.gmra.mxu0 %v413
  %v484 = vpop.f32.mrf.mxu0
  %v485 = vadd.f32 %v410, %v484
  %v486 = vpop.f32.mrf.mxu0
  %487 = vdwg.mxu0
  %vm488 = vcmask 58368
  %489 = vst.msk [vmem:[%s11] sm:$0x3] %vm488, %v485
  // Predicated region
  $region46: #{simple_cnn_forward.1} parent=0 // pred_check
    _
  $region47: #{simple_cnn_forward.1} parent=0 // pred_check_branch
    %491 = sbr.rel (0) target = $region49
  $region48: #{simple_cnn_forward.1} parent=0 // pred_region
    _
  $region49: #{simple_cnn_forward.1} parent=0 // pred_fallthru
    _
  // Predicated region
  $region50: #{simple_cnn_forward.1} parent=0 // pred_check
    _
  $region51: #{simple_cnn_forward.1} parent=0 // pred_check_branch
    %493 = sbr.rel (0) target = $region53
  $region52: #{simple_cnn_forward.1} parent=0 // pred_region
    _
  $region53: #{simple_cnn_forward.1} parent=0 // pred_fallthru
    _

</llo_original>
